<compile_context>
chip_gen: v6e
topology: v6e:2x2x1
jax: 0.10.0
libtpu: 0.0.40
codegen_flags: <defaults>
</compile_context>

<pallas_src>
import jax
import jax.numpy as jnp
from jax.experimental import pallas as pl
from jax.experimental.pallas import tpu as pltpu


# ----------------------------- kernels --------------------------------------


def _se_reduce_kernel(x_ref, sum_ref):
    # x_ref:   (1, C, TS)  one spatial tile of one batch element (native dtype)
    # sum_ref: (1, C, 1)   f32 per-channel running sum; the output block index
    #                      is constant along the spatial grid axis, so it stays
    #                      resident in VMEM and acts as an accumulator.
    @pl.when(pl.program_id(1) == 0)
    def _():
        sum_ref[...] = jnp.zeros_like(sum_ref)

    xb = x_ref[0]                                        # (C, TS), no full-tile upcast
    ts = xb.shape[-1]
    # Accumulate lane-tile columns with pure VPU adds (f32 accumulation),
    # leaving a single cross-lane reduce of one (C, 128) slab at the end.
    acc = xb[:, 0:128].astype(jnp.float32)               # (C, 128)
    for t in range(1, ts // 128):
        acc = acc + xb[:, t * 128:(t + 1) * 128].astype(jnp.float32)
    sum_ref[0] += jnp.sum(acc, axis=-1, keepdims=True)   # (C, 1)


def _se_scale_kernel(gate_ref, x_ref, o_ref):
    # gate_ref: (1, C, 1) f32 per-(batch, channel) gate
    # x_ref / o_ref: (1, C, TS) native dtype
    g = gate_ref[...].astype(o_ref.dtype)                # tiny cast; broadcast over lanes
    o_ref[...] = x_ref[...] * g


# ----------------------------- wrapper ---------------------------------------


def _pick_spatial_tile(S, C, itemsize, target_bytes=2 * 1024 * 1024):
    """Lane-aligned (multiple of 128) spatial tile of ~a few MiB per block."""
    s_pad128 = ((S + 127) // 128) * 128
    ts = 8192
    while ts > 512 and C * ts * itemsize > target_bytes:
        ts //= 2
    if ts >= s_pad128:
        return s_pad128
    return ts


def se_block_3d(x, w1, w2, spatial_tile=None):
    """x: (B, C, D, H, W); w1: (C, C//r); w2: (C//r, C). Returns (B, C, D, H, W)."""
    B, C, D, H, W = x.shape
    S = D * H * W
    x_flat = x.reshape(B, C, S)

    if spatial_tile is None:
        TS = _pick_spatial_tile(S, C, jnp.dtype(x.dtype).itemsize)
    else:
        assert spatial_tile % 128 == 0, "spatial_tile must be a multiple of 128"
        TS = spatial_tile

    S_pad = pl.cdiv(S, TS) * TS
    if S_pad != S:
        # Zero padding: does not perturb the sums; padded output is sliced off.
        x_flat = jnp.pad(x_flat, ((0, 0), (0, 0), (0, S_pad - S)))
    n_s = S_pad // TS

    # ---- pass 1: per-channel spatial sums (f32 accumulation) ----------------
    sums = pl.pallas_call(
        _se_reduce_kernel,
        out_shape=jax.ShapeDtypeStruct((B, C, 1), jnp.float32),
        grid_spec=pltpu.PrefetchScalarGridSpec(
            num_scalar_prefetch=0,
            grid=(B, n_s),
            in_specs=[pl.BlockSpec((1, C, TS), lambda b, s: (b, 0, s))],
            out_specs=pl.BlockSpec((1, C, 1), lambda b, s: (b, 0, 0)),
        ),
        compiler_params=pltpu.CompilerParams(
            dimension_semantics=("parallel", "arbitrary")),
    )(x_flat)

    # ---- excitation: two tiny matmuls + sigmoid, once for all B (plain JAX) -
    y = sums[:, :, 0] / jnp.float32(S)                       # mean over true S
    h = jnp.maximum(jnp.dot(y, w1.astype(jnp.float32)), 0.0)  # (B, Cr)
    gate = jax.nn.sigmoid(jnp.dot(h, w2.astype(jnp.float32)))  # (B, C)
    gate = gate[:, :, None]                                   # (B, C, 1)

    # ---- pass 2: stream x and scale by the per-channel gate ----------------
    out_flat = pl.pallas_call(
        _se_scale_kernel,
        out_shape=jax.ShapeDtypeStruct((B, C, S_pad), x.dtype),
        grid_spec=pltpu.PrefetchScalarGridSpec(
            num_scalar_prefetch=0,
            grid=(B, n_s),
            in_specs=[
                pl.BlockSpec((1, C, 1), lambda b, s: (b, 0, 0)),
                pl.BlockSpec((1, C, TS), lambda b, s: (b, 0, s)),
            ],
            out_specs=pl.BlockSpec((1, C, TS), lambda b, s: (b, 0, s)),
        ),
        compiler_params=pltpu.CompilerParams(
            dimension_semantics=("parallel", "parallel")),
    )(gate, x_flat)

    return out_flat[:, :, :S].reshape(B, C, D, H, W)


# ----------------------------- reference & test ------------------------------


def _se_block_ref(x, w1, w2):
    """Pure-JAX reference matching the PyTorch forward."""
    y = jnp.mean(x, axis=(2, 3, 4))                  # (B, C)
    h = jnp.maximum(y @ w1, 0.0)                     # (B, Cr)
    s = jax.nn.sigmoid(h @ w2)                       # (B, C)
    return x * s[:, :, None, None, None]


def _check(key, shape, spatial_tile=None):
    kx, k1, k2 = jax.random.split(key, 3)
    B, C, D, H, W = shape
    reduction = 16
    Cr = max(C // reduction, 1)
    x = jax.random.normal(kx, (B, C, D, H, W), dtype=jnp.float32)
    # Linear(C, Cr).weight is (Cr, C); we store its transpose (and vice versa).
    w1 = (jax.random.normal(k1, (Cr, C), dtype=jnp.float32) * 0.1).T   # (C, Cr)
    w2 = (jax.random.normal(k2, (C, Cr), dtype=jnp.float32) * 0.1).T   # (Cr, C)

    out = se_block_3d(x, w1, w2, spatial_tile=spatial_tile)
    out = jax.block_until_ready(out)
    ref = _se_block_ref(x, w1, w2)
    assert out.shape == (B, C, D, H, W)
    assert jnp.allclose(out, ref, atol=1e-5, rtol=1e-5)


if __name__ == "__main__":
    key = jax.random.PRNGKey(0)
    k0, k1, k2 = jax.random.split(key, 3)

    # Small shapes consistent with the module: channel=32, reduction=16 -> hidden=2.
    _check(k0, (2, 32, 8, 8, 8))                      # single spatial tile
    _check(k1, (2, 32, 8, 8, 8), spatial_tile=128)    # multi-tile: exercises the
                                                      # cross-tile f32 accumulation
    _check(k2, (1, 32, 7, 7, 7))                      # non-128 spatial (343 -> 384 pad)

    print("KERNEL_OK")
</pallas_src>

<mosaic_0001>
module attributes {stable_mosaic.version = 11 : i64} {
  func.func @_se_reduce_kernel(%arg0: i32, %arg1: i32, %arg2: memref<1x32x512xf32, #tpu.memory_space<vmem>>, %arg3: memref<1x32x1xf32, #tpu.memory_space<vmem>>) attributes {dimension_semantics = [#tpu.dimension_semantics<parallel>, #tpu.dimension_semantics<arbitrary>], iteration_bounds = array<i64: 2, 1>, scalar_prefetch = 0 : i64, scratch_operands = 0 : i64, tpu.core_type = #tpu.core_type<tc>, window_params = [{transform_indices = @transform_0, window_bounds = array<i64: 1, 32, 512>}, {transform_indices = @transform_1, window_bounds = array<i64: 1, 32, 1>}]} {
    %c0_i32 = arith.constant 0 : i32
    %0 = arith.cmpi eq, %arg1, %c0_i32 : i32
    %1 = arith.extui %0 : i1 to i32
    %c0_i32_0 = arith.constant 0 : i32
    %2 = arith.cmpi ne, %1, %c0_i32_0 : i32
    scf.if %2 {
      %cst_9 = arith.constant 0.000000e+00 : f32
      %20 = vector.broadcast %cst_9 : f32 to vector<1x32x1xf32>
      %c0_10 = arith.constant 0 : index
      %c0_11 = arith.constant 0 : index
      %c0_12 = arith.constant 0 : index
      %21 = vector.load %arg3[%c0_10, %c0_11, %c0_12] : memref<1x32x1xf32, #tpu.memory_space<vmem>>, vector<1x32x1xf32>
      tpu.vector_store %arg3[%c0_10, %c0_11, %c0_12], %20 {strides = array<i32>} : memref<1x32x1xf32, #tpu.memory_space<vmem>>, vector<1x32x1xf32>,
    } else {
    }
    %c0 = arith.constant 0 : index
    %c0_1 = arith.constant 0 : index
    %c0_2 = arith.constant 0 : index
    %3 = vector.load %arg2[%c0, %c0_1, %c0_2] : memref<1x32x512xf32, #tpu.memory_space<vmem>>, vector<1x32x512xf32>
    %4 = vector.shape_cast %3 : vector<1x32x512xf32> to vector<32x512xf32>
    %5 = vector.extract_strided_slice %4 {offsets = [0, 0], sizes = [32, 128], strides = [1, 1]} : vector<32x512xf32> to vector<32x128xf32>
    %6 = vector.extract_strided_slice %4 {offsets = [0, 128], sizes = [32, 128], strides = [1, 1]} : vector<32x512xf32> to vector<32x128xf32>
    %7 = arith.addf %5, %6 : vector<32x128xf32>
    %8 = vector.extract_strided_slice %4 {offsets = [0, 256], sizes = [32, 128], strides = [1, 1]} : vector<32x512xf32> to vector<32x128xf32>
    %9 = arith.addf %7, %8 : vector<32x128xf32>
    %10 = vector.extract_strided_slice %4 {offsets = [0, 384], sizes = [32, 128], strides = [1, 1]} : vector<32x512xf32> to vector<32x128xf32>
    %11 = arith.addf %9, %10 : vector<32x128xf32>
    %c0_3 = arith.constant 0 : index
    %c0_4 = arith.constant 0 : index
    %c0_5 = arith.constant 0 : index
    %12 = vector.load %arg3[%c0_3, %c0_4, %c0_5] : memref<1x32x1xf32, #tpu.memory_space<vmem>>, vector<1x32x1xf32>
    %13 = vector.shape_cast %12 : vector<1x32x1xf32> to vector<32x1xf32>
    %cst = arith.constant dense<0.000000e+00> : vector<32xf32>
    %14 = vector.multi_reduction <add>, %11, %cst [1] : vector<32x128xf32> to vector<32xf32>
    %15 = vector.shape_cast %14 : vector<32xf32> to vector<32x1xf32>
    %16 = arith.addf %13, %15 : vector<32x1xf32>
    %c0_6 = arith.constant 0 : index
    %c0_7 = arith.constant 0 : index
    %c0_8 = arith.constant 0 : index
    %17 = vector.load %arg3[%c0_6, %c0_7, %c0_8] : memref<1x32x1xf32, #tpu.memory_space<vmem>>, vector<1x32x1xf32>
    %18 = vector.shape_cast %17 : vector<1x32x1xf32> to vector<32x1xf32>
    %19 = vector.shape_cast %16 : vector<32x1xf32> to vector<1x32x1xf32>
    tpu.vector_store %arg3[%c0_6, %c0_7, %c0_8], %19 {strides = array<i32>} : memref<1x32x1xf32, #tpu.memory_space<vmem>>, vector<1x32x1xf32>,
    return
  }
  func.func @transform_0(%arg0: i32, %arg1: i32) -> (i32, i32, i32) {
    %c0_i32 = arith.constant 0 : i32
    %c0_i32_0 = arith.constant 0 : i32
    return %arg0, %c0_i32, %arg1 : i32, i32, i32
  }
  func.func @transform_1(%arg0: i32, %arg1: i32) -> (i32, i32, i32) {
    %c0_i32 = arith.constant 0 : i32
    %c0_i32_0 = arith.constant 0 : i32
    %c0_i32_1 = arith.constant 0 : i32
    return %arg0, %c0_i32, %c0_i32_0 : i32, i32, i32
  }
}

</mosaic_0001>

<llo_original>
// kernel: tpu_custom_call.1
$region0: #{tpu_custom_call.1}
  #allocation0 [shape = 'u32[]', space=smem, size = 0x4, offset = 0x4, fixed_abs, tag = 'smem constant byte address 0x4 - core index']
  #allocation1 [shape = 'u32[144,128]{1,0:T(1,128)}', space=vmem, size = 0x12000, scoped, tag = 'internal scratch']
  %s0 = inlined_call_operand.hbm [shape: f32[2,32,512], index: 0, kind: input, shape index: {}]
  %s1 = inlined_call_operand.vmem [shape: f32[2,32,1], index: 1, kind: output, shape index: {}]
  %s2 = sld [smem:[#allocation0]]
  $region45: #{tpu_custom_call.1} parent=0
    _
  %s4 = ssub.s32 1, %s2
  %s5 = scalar_select 0, %s4, %s2
  $region1: #{tpu_custom_call.1} parent=0
    #allocation2 [shape = 'u8[131072]{0}', space=vmem, size = 0x20000, scoped, tag = 'input window, operand 0']
    #allocation3 [shape = 's32[2]{0}', space=sflag, size = 0x8, scoped, tag = 'scoped memory for tpu_custom_call.1']
    %6 = vsyncpa [#allocation3], 0
    %s7 = scalar_lea.sflag [#allocation3], 1
    %8 = vsyncpa %s7, 0
    loop: start=0, step=1, limit=4
    $region2: #{tpu_custom_call.1} parent=1 // loop_pre_header
      _
    $region3: #{tpu_custom_call.1} parent=1 // loop_header
      %s10 = sphi 0, %s14
      %p11 = scmp.ge.s32.totalorder %s10, 4
      %s17 = sphi 0, %s29
      %s18 = sphi 0, %s25
      %s19 = sphi 0, %s17
      %s20 = sphi 0, %s18
      %s21 = sphi 0, %s19
      %s22 = sphi 0, %s20
      %s34 = sphi 0, %s36
      %s37 = sphi 0, %s34
      %s38 = sphi 0, %s37
      %s54 = sphi 0, %s38
      %s60 = sphi 0, %s62
      %s63 = sphi 0, %s60
      %s64 = sphi 0, %s63
      %s80 = sphi 0, %s64
    $region4: #{tpu_custom_call.1} parent=1 // loop_header_branch
      %13 = sbr.rel (%p11) target = $region8
    $region5: #{tpu_custom_call.1} parent=1 // loop_body
      %s15 = ssub.s32 %s10, 1
      %s16 = ssub.s32 %s10, 2
      %s23 = sadd.s32 1, %s18
      %p24 = scmp.ge.s32.totalorder %s23, 1
      %s25 = scalar_select %p24, 0, %s23
      %s26 = sadd.s32 1, %s17
      %s27 = scalar_select %p24, %s26, %s17
      %p28 = scmp.ge.s32.totalorder %s27, 2
      %s29 = scalar_select %p28, 0, %s27
      %s30 = ssub.s32 %s17, %s29
      %s31 = ssub.s32 %s18, %s25
      %s32 = sor.u32 %s30, %s31
      %p33 = scmp.eq.s32.totalorder %s32, 0
      %s35 = sadd.s32 %s34, 1
      %s36 = scalar_select %p33, %s34, %s35
      %p39 = pneg %p33
      %p40 = scmp.eq.s32.totalorder %s10, 1
      %p41 = por %p39, %p40
      %p42 = scmp.ne.s32.totalorder %s34, %s37
      %p43 = scmp.eq.s32.totalorder %s10, 0
      %p44 = por %p42, %p43
      %p45 = scmp.ne.s32.totalorder %s34, %s37
      %p46 = scmp.eq.s32.totalorder %s15, 1
      %p47 = por %p45, %p46
      %p48 = scmp.ne.s32.totalorder %s37, %s38
      %p49 = scmp.eq.s32.totalorder %s15, 0
      %p50 = por %p48, %p49
      %p51 = scmp.ne.s32.totalorder %s37, %s38
      %p52 = scmp.eq.s32.totalorder %s16, 1
      %p53 = por %p51, %p52
      %p55 = scmp.ne.s32.totalorder %s38, %s54
      %p56 = scmp.eq.s32.totalorder %s16, 0
      %p57 = por %p55, %p56
      %s58 = ssub.s32 %s17, %s29
      %p59 = scmp.eq.s32.totalorder %s58, 0
      %s61 = sadd.s32 %s60, 1
      %s62 = scalar_select %p59, %s60, %s61
      %p65 = pneg %p59
      %p66 = scmp.eq.s32.totalorder %s10, 1
      %p67 = por %p65, %p66
      %p68 = scmp.ne.s32.totalorder %s60, %s63
      %p69 = scmp.eq.s32.totalorder %s10, 0
      %p70 = por %p68, %p69
      %p71 = scmp.ne.s32.totalorder %s60, %s63
      %p72 = scmp.eq.s32.totalorder %s15, 1
      %p73 = por %p71, %p72
      %p74 = scmp.ne.s32.totalorder %s63, %s64
      %p75 = scmp.eq.s32.totalorder %s15, 0
      %p76 = por %p74, %p75
      %p77 = scmp.ne.s32.totalorder %s63, %s64
      %p78 = scmp.eq.s32.totalorder %s16, 1
      %p79 = por %p77, %p78
      %p81 = scmp.ne.s32.totalorder %s64, %s80
      %p82 = scmp.eq.s32.totalorder %s16, 0
      %p83 = por %p81, %p82
      %p84 = scmp.le.s32.totalorder 1, %s10
      %p85 = scmp.lt.s32.totalorder %s10, 3
      %p86 = pnand %p84, %p85
      %p87 = pneg %p86
      // Predicated region
      $region9: #{tpu_custom_call.1} parent=5 // pred_check
        _
      $region10: #{tpu_custom_call.1} parent=5 // pred_check_branch
        %89 = sbr.rel (%p86) target = $region12
      $region11: #{tpu_custom_call.1} parent=5 // pred_region
        %s90 = ssub.s32 %s10, 1
      $region12: #{tpu_custom_call.1} parent=5 // pred_fallthru
        _
      %p91 = scmp.lt.s32.totalorder %s10, 2
      // Predicated region
      $region13: #{tpu_custom_call.1} parent=5 // pred_check
        %p92 = pneg %p91
      $region14: #{tpu_custom_call.1} parent=5 // pred_check_branch
        %94 = sbr.rel (%p92) target = $region16
      $region15: #{tpu_custom_call.1} parent=5 // pred_region
        // Predicated region
        $region17: #{tpu_custom_call.1} parent=15 // pred_check
          %p95 = pneg %p44
        $region18: #{tpu_custom_call.1} parent=15 // pred_check_branch
          %97 = sbr.rel (%p95) target = $region20
        $region19: #{tpu_custom_call.1} parent=15 // pred_region
          %s98 = sand.u32 %s34, 1
          %s99 = scalar_lea.sflag [#allocation3], %s98
          %s100 = sand.u32 %s34, 1
          %s101 = smul.addr %s100, 128
          %s102 = scalar_lea.vmem [#allocation2], %s101
          %s103 = smul.u32 4, %s18
          %s105 = ssub.s32 2048, 2048
          %106 = vsyncadd %s99, %s105
          %s107 = smul.addr %s17, 16
          %s108 = sadd.s32 %s103, %s107
          %s109 = smul.addr %s108, 128
          %s110 = scalar_lea.hbm %s0, %s109
          %s111 = sshll.u32 %s102, 4
          %s112 = int_to_ptr.vmem [resolvable:$true] %s111
          %117 = dma.hbm_to_vmem [thread:$0]  %s110, 2048, %s112, %s99, 512, 512, 32
        $region20: #{tpu_custom_call.1} parent=15 // pred_fallthru
          _
      $region16: #{tpu_custom_call.1} parent=5 // pred_fallthru
        _
      %p118 = scmp.le.s32.totalorder 1, %s10
      %p119 = scmp.lt.s32.totalorder %s10, 3
      %p120 = pnand %p118, %p119
      %p121 = pneg %p120
      // Predicated region
      $region21: #{tpu_custom_call.1} parent=5 // pred_check
        _
      $region22: #{tpu_custom_call.1} parent=5 // pred_check_branch
        %123 = sbr.rel (%p120) target = $region24
      $region23: #{tpu_custom_call.1} parent=5 // pred_region
        %s124 = ssub.s32 %s10, 1
        %s125 = sand.u32 %s37, 1
        %s126 = scalar_lea.sflag [#allocation3], %s125
        %s127 = sand.u32 %s37, 1
        %s128 = smul.addr %s127, 128
        %s129 = scalar_lea.vmem [#allocation2], %s128
        // Predicated region
        $region25: #{tpu_custom_call.1} parent=23 // pred_check
          %p130 = pneg %p50
        $region26: #{tpu_custom_call.1} parent=23 // pred_check_branch
          %132 = sbr.rel (%p130) target = $region28
        $region27: #{tpu_custom_call.1} parent=23 // pred_region
          %133 = dma.done %s126, 2048
        $region28: #{tpu_custom_call.1} parent=23 // pred_fallthru
          _
        %s134 = sand.u32 %s37, 1
        %s135 = scalar_lea.sflag [#allocation3], %s134
        %s136 = sand.u32 %s37, 1
        %s137 = smul.addr %s136, 128
        %s138 = scalar_lea.vmem [#allocation2], %s137
        %p139 = pneg %p50
        %p140 = pneg %p47
        %p141 = pneg %p76
        %p142 = pneg %p73
        %p143 = scmp.lt.s32.totalorder %s19, 1
        %s144 = scalar_select %p143, %s19, 1
        %s145 = smul.addr %s144, 4
        %s146 = smul.addr %s145, 8
        %s147 = scalar_lea.vmem %s1, %s146
        %s148 = smul.u32 4, %s20
        %p149 = scmp.lt.s32.totalorder %s19, 1
        %s150 = scalar_select %p149, %s19, 1
        %s151 = smul.addr %s150, 4
        %s152 = smul.addr %s151, 8
        %s153 = scalar_lea.vmem %s1, %s152
        %p154 = scmp.eq.s32.totalorder %s20, 0
        // Predicated region
        $region29: #{tpu_custom_call.1} parent=23 // pred_check
          %p155 = pneg %p154
        $region30: #{tpu_custom_call.1} parent=23 // pred_check_branch
          %157 = sbr.rel (%p155) target = $region32
        $region31: #{tpu_custom_call.1} parent=23 // pred_region
          %vm158 = vcmask 7168
          %159 = vst.msk [vmem:[%s153] sm:$0xff] %vm158, 0.0
          %160 = vst.msk [vmem:[%s153 + $0x8] sm:$0xff] %vm158, 0.0
          %161 = vst.msk [vmem:[%s153 + $0x10] sm:$0xff] %vm158, 0.0
          %162 = vst.msk [vmem:[%s153 + $0x18] sm:$0xff] %vm158, 0.0
        $region32: #{tpu_custom_call.1} parent=23 // pred_fallthru
          _
        %v163 = vld [vmem:[%s129] sm:$0xff]
        %v164 = vld [vmem:[%s129 + $0x8] sm:$0xff]
        %v165 = vld [vmem:[%s129 + $0x10] sm:$0xff]
        %v166 = vld [vmem:[%s129 + $0x18] sm:$0xff]
        %v167 = vld [vmem:[%s129 + $0x20] sm:$0xff]
        %v168 = vld [vmem:[%s129 + $0x28] sm:$0xff]
        %v169 = vld [vmem:[%s129 + $0x30] sm:$0xff]
        %v170 = vld [vmem:[%s129 + $0x38] sm:$0xff]
        %v171 = vld [vmem:[%s129 + $0x40] sm:$0xff]
        %v172 = vld [vmem:[%s129 + $0x48] sm:$0xff]
        %v173 = vld [vmem:[%s129 + $0x50] sm:$0xff]
        %v174 = vld [vmem:[%s129 + $0x58] sm:$0xff]
        %v175 = vld [vmem:[%s129 + $0x60] sm:$0xff]
        %v176 = vld [vmem:[%s129 + $0x68] sm:$0xff]
        %v177 = vld [vmem:[%s129 + $0x70] sm:$0xff]
        %v178 = vld [vmem:[%s129 + $0x78] sm:$0xff]
        %v179 = vadd.f32 %v163, %v164
        %v180 = vadd.f32 %v167, %v168
        %v181 = vadd.f32 %v171, %v172
        %v182 = vadd.f32 %v175, %v176
        %v183 = vadd.f32 %v179, %v165
        %v184 = vadd.f32 %v180, %v169
        %v185 = vadd.f32 %v181, %v173
        %v186 = vadd.f32 %v182, %v177
        %v187 = vadd.f32 %v183, %v166
        %v188 = vadd.f32 %v184, %v170
        %v189 = vadd.f32 %v185, %v174
        %v190 = vadd.f32 %v186, %v178
        %v191 = vld [vmem:[%s153] sm:$0xff]
        %v192 = vld [vmem:[%s153 + $0x8] sm:$0xff]
        %v193 = vld [vmem:[%s153 + $0x10] sm:$0xff]
        %v194 = vld [vmem:[%s153 + $0x18] sm:$0xff]
        %195 = vadd.xlane.f32.xlu0 %v187
        %v196 = vpop.xlane.xlu0 %195
        %197 = vadd.xlane.f32.xlu0 %v188
        %v198 = vpop.xlane.xlu0 %197
        %199 = vadd.xlane.f32.xlu0 %v189
        %v200 = vpop.xlane.xlu0 %199
        %201 = vadd.xlane.f32.xlu0 %v190
        %v202 = vpop.xlane.xlu0 %201
        %v203 = vadd.f32 %v191, %v196
        %v204 = vadd.f32 %v192, %v198
        %v205 = vadd.f32 %v193, %v200
        %v206 = vadd.f32 %v194, %v202
        %vm207 = vcmask 7168
        %208 = vst.msk [vmem:[%s153] sm:$0xff] %vm207, %v203
        %209 = vst.msk [vmem:[%s153 + $0x8] sm:$0xff] %vm207, %v204
        %210 = vst.msk [vmem:[%s153 + $0x10] sm:$0xff] %vm207, %v205
        %211 = vst.msk [vmem:[%s153 + $0x18] sm:$0xff] %vm207, %v206
        %p212 = scmp.lt.s32.totalorder %s19, 1
        %s213 = scalar_select %p212, %s19, 1
        %s214 = smul.addr %s213, 4
        %s215 = smul.addr %s214, 8
        %s216 = scalar_lea.vmem %s1, %s215
        // Predicated region
        $region33: #{tpu_custom_call.1} parent=23 // pred_check
          %p217 = pneg %p73
        $region34: #{tpu_custom_call.1} parent=23 // pred_check_branch
          %219 = sbr.rel (%p217) target = $region36
        $region35: #{tpu_custom_call.1} parent=23 // pred_region
          _
        $region36: #{tpu_custom_call.1} parent=23 // pred_fallthru
          _
      $region24: #{tpu_custom_call.1} parent=5 // pred_fallthru
        _
      %p220 = scmp.le.s32.totalorder 2, %s10
      // Predicated region
      $region37: #{tpu_custom_call.1} parent=5 // pred_check
        %p221 = pneg %p220
      $region38: #{tpu_custom_call.1} parent=5 // pred_check_branch
        %223 = sbr.rel (%p221) target = $region40
      $region39: #{tpu_custom_call.1} parent=5 // pred_region
        %s224 = ssub.s32 %s10, 2
        // Predicated region
        $region41: #{tpu_custom_call.1} parent=39 // pred_check
          %p225 = pneg %p79
        $region42: #{tpu_custom_call.1} parent=39 // pred_check_branch
          %227 = sbr.rel (%p225) target = $region44
        $region43: #{tpu_custom_call.1} parent=39 // pred_region
          %p228 = scmp.lt.s32.totalorder %s21, 1
          %s229 = scalar_select %p228, %s21, 1
          %s230 = smul.addr %s229, 4
          %s231 = smul.addr %s230, 8
          %s232 = scalar_lea.vmem %s1, %s231
        $region44: #{tpu_custom_call.1} parent=39 // pred_fallthru
          _
      $region40: #{tpu_custom_call.1} parent=5 // pred_fallthru
        _
    $region6: #{tpu_custom_call.1} parent=1 // loop_footer
      %s14 = sadd.s32 1, %s10
    $region7: #{tpu_custom_call.1} parent=1 // loop_footer_branch
      %9 = sbr.rel target = $region3
    $region8: #{tpu_custom_call.1} parent=1 // loop_exit
      _
    %233 = vsyncpa [#allocation3], 1
    %s234 = scalar_lea.sflag [#allocation3], 1
    %235 = vsyncpa %s234, 1

</llo_original>
